<compile_context>
chip_gen: v6e
topology: v6e:2x2x1
jax: 0.10.0
libtpu: 0.0.40
codegen_flags: <defaults>
</compile_context>

<pallas_src>
import jax
import jax.numpy as jnp
from jax.experimental import pallas as pl
from jax.experimental.pallas import tpu as pltpu

GRAD_CLAMP = 0.01
LANES = 512                 # lane-dense last dim (multiple of 128 -> unmasked vst)
_PALLAS_MIN_ELEMS = 64 * 1024  # below this, fused XLA elementwise beats a kernel launch


def _grad_clip_kernel(g_ref, o_ref):
    g = g_ref[...]
    g = jnp.where(jnp.isnan(g), jnp.zeros_like(g), g)
    o_ref[...] = jnp.clip(g, -GRAD_CLAMP, GRAD_CLAMP).astype(o_ref.dtype)


def _round_up(a, b):
    return -(-a // b) * b


def _max_tile_rows():
    """Per-chip row tile: bigger blocks on v6e/v7x to amortize ~0.35us/step."""
    try:
        kind = jax.devices()[0].device_kind.lower()
    except Exception:
        kind = ""
    if "v6" in kind or "v7" in kind:
        return 2048   # 4 MiB f32 block -> 16 MiB double-buffered in+out
    return 1024       # v5e & unknown: 2 MiB block, safely under scoped VMEM defaults


def _grad_clip_pallas(g):
    """NaN-scrub + clamp over a lane-dense (rows, 512) slab. Requires size % LANES == 0."""
    shape, dtype = g.shape, g.dtype
    rows = g.size // LANES
    tile_rows = min(_max_tile_rows(), _round_up(rows, 8))  # sublane-aligned tile

    g2 = g.reshape(rows, LANES)
    out = pl.pallas_call(
        _grad_clip_kernel,
        out_shape=jax.ShapeDtypeStruct((rows, LANES), dtype),
        grid_spec=pltpu.PrefetchScalarGridSpec(
            num_scalar_prefetch=0,
            grid=(pl.cdiv(rows, tile_rows),),        # partial last block handled by Pallas
            in_specs=[pl.BlockSpec((tile_rows, LANES), lambda i: (i, 0))],
            out_specs=pl.BlockSpec((tile_rows, LANES), lambda i: (i, 0)),
        ),
        compiler_params=pltpu.CompilerParams(
            dimension_semantics=("parallel",),
            vmem_limit_bytes=32 << 20,
        ),
        input_output_aliases={0: 0},                 # cotangent buffer is dead after clip
    )(g2)
    return out.reshape(shape)


def _grad_clip(g):
    """Dispatch: Pallas for large lane-aligned gradients, fused XLA otherwise."""
    if g.size == 0:
        return g
    if g.size < _PALLAS_MIN_ELEMS or (g.size % LANES) != 0:
        # Small or ragged: a single fused elementwise pass, no pad / launch overhead.
        return jnp.clip(jnp.where(jnp.isnan(g), jnp.zeros_like(g), g),
                        -GRAD_CLAMP, GRAD_CLAMP)
    return _grad_clip_pallas(g)


@jax.custom_vjp
def gradient_clip(x):
    """Forward of GradientClip: pure identity (no kernel, no HBM traffic)."""
    return x


def _gradient_clip_fwd(x):
    return x, None


def _gradient_clip_bwd(_, g):
    return (_grad_clip(g),)


gradient_clip.defvjp(_gradient_clip_fwd, _gradient_clip_bwd)


if __name__ == "__main__":
    key = jax.random.PRNGKey(0)
    kx, kg, kp = jax.random.split(key, 3)

    B, C, H, W = 2, 4, 16, 16
    x = jax.random.normal(kx, (B, C, H, W), dtype=jnp.float32)

    # Forward: identity (returned directly).
    y = gradient_clip(x)
    jax.block_until_ready(y)
    assert y.shape == x.shape and y.dtype == x.dtype
    assert bool(jnp.array_equal(y, x))

    # Backward via custom_vjp: NaNs zeroed, then clamped to [-0.01, 0.01].
    _, vjp_fn = jax.vjp(gradient_clip, x)
    g = 0.05 * jax.random.normal(kg, x.shape, dtype=jnp.float32)
    g = g.at[0, 0, 0, 0].set(jnp.nan)
    (dx,) = vjp_fn(g)
    jax.block_until_ready(dx)
    ref = jnp.clip(jnp.where(jnp.isnan(g), 0.0, g), -GRAD_CLAMP, GRAD_CLAMP)
    assert float(jnp.max(jnp.abs(dx - ref))) < 1e-7

    # Directly exercise the Pallas backward kernel on a lane-aligned slab
    # (the dispatcher would route a tensor this small to the XLA fallback).
    gp = 0.05 * jax.random.normal(kp, (16, LANES), dtype=jnp.float32)
    gp = gp.at[0, 0].set(jnp.nan)
    gp = gp.at[3, 7].set(jnp.inf)
    gp = gp.at[5, 11].set(-jnp.inf)
    refp = jnp.clip(jnp.where(jnp.isnan(gp), 0.0, gp), -GRAD_CLAMP, GRAD_CLAMP)
    dp = _grad_clip_pallas(gp)
    jax.block_until_ready(dp)
    assert float(jnp.max(jnp.abs(dp - refp))) < 1e-7

    print("KERNEL_OK")
</pallas_src>

<mosaic_0001>
module attributes {stable_mosaic.version = 11 : i64} {
  func.func @_grad_clip_kernel(%arg0: i32, %arg1: memref<16x512xf32, #tpu.memory_space<vmem>>, %arg2: memref<16x512xf32, #tpu.memory_space<vmem>>) attributes {dimension_semantics = [#tpu.dimension_semantics<parallel>], iteration_bounds = array<i64: 1>, scalar_prefetch = 0 : i64, scratch_operands = 0 : i64, tpu.core_type = #tpu.core_type<tc>, window_params = [{transform_indices = @transform_0, window_bounds = array<i64: 16, 512>}, {transform_indices = @transform_1, window_bounds = array<i64: 16, 512>}]} {
    %c0 = arith.constant 0 : index
    %c0_0 = arith.constant 0 : index
    %0 = vector.load %arg1[%c0, %c0_0] : memref<16x512xf32, #tpu.memory_space<vmem>>, vector<16x512xf32>
    %1 = arith.cmpf one, %0, %0 : vector<16x512xf32>
    %cst = arith.constant 0.000000e+00 : f32
    %2 = vector.broadcast %cst : f32 to vector<16x512xf32>
    %3 = arith.select %1, %2, %0 : vector<16x512xi1>, vector<16x512xf32>
    %cst_1 = arith.constant -0.00999999977 : f32
    %cst_2 = arith.constant 0.00999999977 : f32
    %4 = vector.broadcast %cst_1 : f32 to vector<16x512xf32>
    %5 = arith.maximumf %4, %3 : vector<16x512xf32>
    %6 = vector.broadcast %cst_2 : f32 to vector<16x512xf32>
    %7 = arith.minimumf %6, %5 : vector<16x512xf32>
    %c0_3 = arith.constant 0 : index
    %c0_4 = arith.constant 0 : index
    %8 = vector.load %arg2[%c0_3, %c0_4] : memref<16x512xf32, #tpu.memory_space<vmem>>, vector<16x512xf32>
    tpu.vector_store %arg2[%c0_3, %c0_4], %7 {strides = array<i32>} : memref<16x512xf32, #tpu.memory_space<vmem>>, vector<16x512xf32>,
    return
  }
  func.func @transform_0(%arg0: i32) -> (i32, i32) {
    %c0_i32 = arith.constant 0 : i32
    %c0_i32_0 = arith.constant 0 : i32
    return %arg0, %c0_i32 : i32, i32
  }
  func.func @transform_1(%arg0: i32) -> (i32, i32) {
    %c0_i32 = arith.constant 0 : i32
    %c0_i32_0 = arith.constant 0 : i32
    return %arg0, %c0_i32 : i32, i32
  }
}

</mosaic_0001>

<llo_original>
// kernel: tpu_custom_call.1
$region0: #{tpu_custom_call.1}
  #allocation0 [shape = 'u32[]', space=smem, size = 0x4, offset = 0x4, fixed_abs, tag = 'smem constant byte address 0x4 - core index']
  #allocation1 [shape = 'u32[144,128]{1,0:T(1,128)}', space=vmem, size = 0x12000, scoped, tag = 'internal scratch']
  %s0 = inlined_call_operand.hbm [shape: f32[16,512], index: 0, kind: input, shape index: {}, may-alias: {0,1}]
  %s1 = inlined_call_operand.hbm [shape: f32[16,512], index: 1, kind: output, shape index: {}, may-alias: {0,1}]
  %s2 = sld [smem:[#allocation0]]
  $region18: #{tpu_custom_call.1} parent=0
    _
  %s4 = ssub.s32 1, %s2
  %s5 = scalar_select 0, %s4, %s2
  $region1: #{tpu_custom_call.1} parent=0
    #allocation2 [shape = 'u8[32768]{0}', space=vmem, size = 0x8000, scoped, tag = 'input window, operand 0, single buffered']
    #allocation3 [shape = 's32[1]{0}', space=sflag, size = 0x4, scoped, tag = 'scoped memory for tpu_custom_call.1']
    #allocation4 [shape = 's32[1]{0}', space=sflag, size = 0x4, scoped, tag = 'scoped memory for tpu_custom_call.1']
    #allocation5 [shape = 'u8[32768]{0}', space=vmem, size = 0x8000, scoped, tag = 'output window, operand 0, single buffered']
    %6 = vsyncpa [#allocation3], 0
    %7 = vsyncpa [#allocation4], 0
    // Predicated region
    $region2: #{tpu_custom_call.1} parent=1 // pred_check
      _
    $region3: #{tpu_custom_call.1} parent=1 // pred_check_branch
      %9 = sbr.rel (0) target = $region5
    $region4: #{tpu_custom_call.1} parent=1 // pred_region
      %s11 = ssub.s32 1024, 1024
      %12 = vsyncadd [#allocation3], %s11
      %s13 = sshll.u32 [#allocation2], 4
      %s14 = int_to_ptr.vmem [resolvable:$true] %s13
      %19 = dma.hbm_to_vmem [thread:$0]  %s0, 1024, %s14, [#allocation3], 512, 512, 32
    $region5: #{tpu_custom_call.1} parent=1 // pred_fallthru
      _
    // Predicated region
    $region6: #{tpu_custom_call.1} parent=1 // pred_check
      _
    $region7: #{tpu_custom_call.1} parent=1 // pred_check_branch
      %21 = sbr.rel (0) target = $region9
    $region8: #{tpu_custom_call.1} parent=1 // pred_region
      %22 = dma.done [#allocation3], 1024
    $region9: #{tpu_custom_call.1} parent=1 // pred_fallthru
      _
    %v23 = vld [vmem:[#allocation2] sm:$0xff]
    %v24 = vld [vmem:[#allocation2 + $0x8] sm:$0xff]
    %v25 = vld [vmem:[#allocation2 + $0x10] sm:$0xff]
    %v26 = vld [vmem:[#allocation2 + $0x18] sm:$0xff]
    %v27 = vld [vmem:[#allocation2 + $0x20] sm:$0xff]
    %v28 = vld [vmem:[#allocation2 + $0x28] sm:$0xff]
    %v29 = vld [vmem:[#allocation2 + $0x30] sm:$0xff]
    %v30 = vld [vmem:[#allocation2 + $0x38] sm:$0xff]
    %vm31 = vcmp.ne.f32.partialorder %v23, %v23
    %vm32 = vcmp.ne.f32.partialorder %v24, %v24
    %vm33 = vcmp.ne.f32.partialorder %v25, %v25
    %vm34 = vcmp.ne.f32.partialorder %v26, %v26
    %vm35 = vcmp.ne.f32.partialorder %v27, %v27
    %vm36 = vcmp.ne.f32.partialorder %v28, %v28
    %vm37 = vcmp.ne.f32.partialorder %v29, %v29
    %vm38 = vcmp.ne.f32.partialorder %v30, %v30
    %v39 = vsel %vm31, 0.0, %v23
    %v40 = vsel %vm32, 0.0, %v24
    %v41 = vsel %vm33, 0.0, %v25
    %v42 = vsel %vm34, 0.0, %v26
    %v43 = vsel %vm35, 0.0, %v27
    %v44 = vsel %vm36, 0.0, %v28
    %v45 = vsel %vm37, 0.0, %v29
    %v46 = vsel %vm38, 0.0, %v30
    %v47 = vmax.f32 %v39, -0.01
    %v48 = vmax.f32 %v40, -0.01
    %v49 = vmax.f32 %v41, -0.01
    %v50 = vmax.f32 %v42, -0.01
    %v51 = vmax.f32 %v43, -0.01
    %v52 = vmax.f32 %v44, -0.01
    %v53 = vmax.f32 %v45, -0.01
    %v54 = vmax.f32 %v46, -0.01
    %v55 = vmin.f32 %v47, 0.01
    %v56 = vmin.f32 %v48, 0.01
    %v57 = vmin.f32 %v49, 0.01
    %v58 = vmin.f32 %v50, 0.01
    %v59 = vmin.f32 %v51, 0.01
    %v60 = vmin.f32 %v52, 0.01
    %v61 = vmin.f32 %v53, 0.01
    %v62 = vmin.f32 %v54, 0.01
    %63 = vst [vmem:[#allocation5] sm:$0xff] %v55
    %64 = vst [vmem:[#allocation5 + $0x8] sm:$0xff] %v56
    %65 = vst [vmem:[#allocation5 + $0x10] sm:$0xff] %v57
    %66 = vst [vmem:[#allocation5 + $0x18] sm:$0xff] %v58
    %67 = vst [vmem:[#allocation5 + $0x20] sm:$0xff] %v59
    %68 = vst [vmem:[#allocation5 + $0x28] sm:$0xff] %v60
    %69 = vst [vmem:[#allocation5 + $0x30] sm:$0xff] %v61
    %70 = vst [vmem:[#allocation5 + $0x38] sm:$0xff] %v62
    // Predicated region
    $region10: #{tpu_custom_call.1} parent=1 // pred_check
      _
    $region11: #{tpu_custom_call.1} parent=1 // pred_check_branch
      %72 = sbr.rel (0) target = $region13
    $region12: #{tpu_custom_call.1} parent=1 // pred_region
      %s74 = ssub.s32 1024, 1024
      %75 = vsyncadd [#allocation4], %s74
      %s76 = sshll.u32 [#allocation5], 4
      %s77 = int_to_ptr.vmem [resolvable:$true] %s76
      %82 = dma.vmem_to_hbm [thread:$0]  %s77, 1024, %s1, [#allocation4], 512, 512, 32
    $region13: #{tpu_custom_call.1} parent=1 // pred_fallthru
      _
    // Predicated region
    $region14: #{tpu_custom_call.1} parent=1 // pred_check
      _
    $region15: #{tpu_custom_call.1} parent=1 // pred_check_branch
      %84 = sbr.rel (0) target = $region17
    $region16: #{tpu_custom_call.1} parent=1 // pred_region
      %85 = dma.done [#allocation4], 1024
    $region17: #{tpu_custom_call.1} parent=1 // pred_fallthru
      _
    %86 = vsyncpa [#allocation3], 1
    %87 = vsyncpa [#allocation4], 1

</llo_original>
